<compile_context>
chip_gen: v6e
topology: v6e:2x2x1
jax: 0.10.0
libtpu: 0.0.40
codegen_flags: <defaults>
</compile_context>

<pallas_src>
import functools

import jax
import jax.numpy as jnp
from jax import lax
from jax.experimental import pallas as pl
from jax.experimental.pallas import tpu as pltpu

BN_EPS = 1e-5
SPLIT_CLASS_THRESHOLD = 3072   # auto-split into two pallas_calls above this class count


def _round_up(a, m):
    return (a + m - 1) // m * m


def _cdiv(a, b):
    return (a + b - 1) // b


def _vmem_capacity_bytes():
    try:
        return int(pltpu.get_tpu_info().vmem_capacity_bytes)
    except Exception:
        return 64 * 1024 * 1024            # conservative (v7x-sized) default


def _vmem_limits():
    cap = _vmem_capacity_bytes()
    vmem_limit = cap * 3 // 4              # leave compiler headroom vs. physical VMEM
    budget = vmem_limit * 4 // 5           # what the class-tile sweep may spend
    return vmem_limit, budget


def _choose_class_tile(K128, per_col_bytes, fixed_bytes, budget_bytes, min_steps):
    """Pick tk (multiple of 128) so K_pad ~= K128 and there are >= min_steps steps."""
    m = K128 // 128                                     # 128-lane column groups
    avail = max(budget_bytes - fixed_bytes, per_col_bytes)
    cap_cols = max(1, avail // per_col_bytes)           # VMEM-limited tile width
    n_tiles = max(min(m, min_steps), _cdiv(m, cap_cols))
    tk_cols = _cdiv(m, n_tiles)
    n_tiles = _cdiv(m, tk_cols)
    tk = tk_cols * 128
    return tk, n_tiles, n_tiles * tk


def _spec(shape, index_map, buffers=None):
    """BlockSpec with an optional multi-buffering hint (fallback: default pipeline)."""
    if buffers is None:
        return pl.BlockSpec(shape, index_map)
    try:
        return pl.BlockSpec(shape, index_map, pipeline_mode=pl.Buffered(buffers))
    except Exception:
        return pl.BlockSpec(shape, index_map)


# --------------------------------------------------------------------------- kernels

def _fused_kernel(x_ref, wred_ref, gamma_ref, beta_ref, wcls_ref,
                  after_ref, score_ref, before_ref,
                  after_bf16_ref, *, batch_size):
    # x_ref:      (B_pad, C_pad)  bf16, zero-padded rows/cols
    # wred_ref:   (C_pad, F_pad)  bf16, 1x1-conv weight transposed, zero-padded
    # gamma/beta: (1, F_pad)      f32 BN params
    # wcls_ref:   (F_pad, tk)     bf16 classifier tile (streamed)
    # after/before_ref: (B_pad, F_pad) f32 resident outputs (written at k == 0)
    # score_ref:  (B_pad, tk)     f32, one classifier tile per grid step
    # after_bf16_ref: VMEM scratch (B_pad, F_pad) bf16, persists across steps
    k = pl.program_id(0)

    @pl.when(k == 0)
    def _():
        # 1x1 conv == bf16 matmul with f32 accumulation on the MXU.
        before = jnp.dot(x_ref[...], wred_ref[...],
                         preferred_element_type=jnp.float32)        # (B_pad, F_pad)
        before_ref[...] = before
        # BatchNorm1d training-mode statistics.  Padded rows of `before` are exactly
        # zero, so plain sums with a 1/B scale are exact (no masks needed);
        # variance via E[x^2] - mean^2 avoids a second full pass.
        inv_b = jnp.float32(1.0 / batch_size)
        mean = jnp.sum(before, axis=0, keepdims=True) * inv_b
        ex2 = jnp.sum(before * before, axis=0, keepdims=True) * inv_b
        var = ex2 - mean * mean                                     # biased variance
        scale = lax.rsqrt(var + BN_EPS) * gamma_ref[...]            # (1, F_pad)
        shift = beta_ref[...] - mean * scale                        # (1, F_pad)
        after = before * scale + shift
        after_ref[...] = after
        after_bf16_ref[...] = after.astype(jnp.bfloat16)

    # Classifier tile (every step): (B_pad, F_pad) @ (F_pad, tk) on the MXU.
    score_ref[...] = jnp.dot(after_bf16_ref[...], wcls_ref[...],
                             preferred_element_type=jnp.float32)


def _conv_bn_kernel(x_ref, wred_ref, gamma_ref, beta_ref,
                    after_ref, before_ref, after_bf16_ref, *, batch_size):
    before = jnp.dot(x_ref[...], wred_ref[...],
                     preferred_element_type=jnp.float32)
    before_ref[...] = before
    inv_b = jnp.float32(1.0 / batch_size)
    mean = jnp.sum(before, axis=0, keepdims=True) * inv_b
    ex2 = jnp.sum(before * before, axis=0, keepdims=True) * inv_b
    var = ex2 - mean * mean
    scale = lax.rsqrt(var + BN_EPS) * gamma_ref[...]
    shift = beta_ref[...] - mean * scale
    after = before * scale + shift
    after_ref[...] = after
    after_bf16_ref[...] = after.astype(jnp.bfloat16)


def _classifier_kernel(after_bf16_ref, wcls_ref, score_ref):
    score_ref[...] = jnp.dot(after_bf16_ref[...], wcls_ref[...],
                             preferred_element_type=jnp.float32)


# --------------------------------------------------------------------------- drivers

def _run_fused(x2d, wred_t, gamma2d, beta2d, wcls_t, *, B, tk, n_tiles, vmem_limit):
    B_pad, C_pad = x2d.shape
    F_pad = wred_t.shape[1]
    kernel = functools.partial(_fused_kernel, batch_size=B)

    def call(use_hints):
        return pl.pallas_call(
            kernel,
            out_shape=(
                jax.ShapeDtypeStruct((B_pad, F_pad), jnp.float32),        # after_neck
                jax.ShapeDtypeStruct((B_pad, n_tiles * tk), jnp.float32),  # score
                jax.ShapeDtypeStruct((B_pad, F_pad), jnp.float32),        # before_neck
            ),
            grid_spec=pltpu.PrefetchScalarGridSpec(
                num_scalar_prefetch=0,
                grid=(n_tiles,),
                in_specs=[
                    pl.BlockSpec((B_pad, C_pad), lambda k: (0, 0)),   # x, resident
                    pl.BlockSpec((C_pad, F_pad), lambda k: (0, 0)),   # wred, resident
                    pl.BlockSpec((1, F_pad), lambda k: (0, 0)),       # gamma, resident
                    pl.BlockSpec((1, F_pad), lambda k: (0, 0)),       # beta, resident
                    _spec((F_pad, tk), lambda k: (0, k),
                          3 if use_hints else None),                  # wcls, streamed
                ],
                out_specs=(
                    pl.BlockSpec((B_pad, F_pad), lambda k: (0, 0)),   # after, resident
                    pl.BlockSpec((B_pad, tk), lambda k: (0, k)),      # score, streamed
                    pl.BlockSpec((B_pad, F_pad), lambda k: (0, 0)),   # before, resident
                ),
                scratch_shapes=[pltpu.VMEM((B_pad, F_pad), jnp.bfloat16)],
            ),
            compiler_params=pltpu.CompilerParams(
                # Resident before/after outputs revisit block (0,0) every step, so the
                # class axis must be "arbitrary" in the fused call.
                dimension_semantics=("arbitrary",),
                vmem_limit_bytes=vmem_limit,
            ),
        )(x2d, wred_t, gamma2d, beta2d, wcls_t)

    try:
        return call(True)
    except Exception:              # Buffered hint not supported -> default pipelining
        return call(False)


def _run_split(x2d, wred_t, gamma2d, beta2d, wcls_t, *, B, tk, n_tiles, vmem_limit):
    B_pad, C_pad = x2d.shape
    F_pad = wred_t.shape[1]

    # Call 1: 1x1 conv + BatchNorm (tiny, single grid step).
    after_p, before_p, after_bf16 = pl.pallas_call(
        functools.partial(_conv_bn_kernel, batch_size=B),
        out_shape=(
            jax.ShapeDtypeStruct((B_pad, F_pad), jnp.float32),    # after_neck (f32)
            jax.ShapeDtypeStruct((B_pad, F_pad), jnp.float32),    # before_neck
            jax.ShapeDtypeStruct((B_pad, F_pad), jnp.bfloat16),   # after (MXU operand)
        ),
        grid_spec=pltpu.PrefetchScalarGridSpec(
            num_scalar_prefetch=0,
            grid=(1,),
            in_specs=[
                pl.BlockSpec((B_pad, C_pad), lambda i: (0, 0)),
                pl.BlockSpec((C_pad, F_pad), lambda i: (0, 0)),
                pl.BlockSpec((1, F_pad), lambda i: (0, 0)),
                pl.BlockSpec((1, F_pad), lambda i: (0, 0)),
            ],
            out_specs=(
                pl.BlockSpec((B_pad, F_pad), lambda i: (0, 0)),
                pl.BlockSpec((B_pad, F_pad), lambda i: (0, 0)),
                pl.BlockSpec((B_pad, F_pad), lambda i: (0, 0)),
            ),
        ),
        compiler_params=pltpu.CompilerParams(
            dimension_semantics=("arbitrary",),
            vmem_limit_bytes=vmem_limit,
        ),
    )(x2d, wred_t, gamma2d, beta2d)

    # Call 2: classifier; class-tile axis is "parallel" so both TensorCores (v7x)
    # pull the dominant wcls weight stream.
    def call(use_hints):
        return pl.pallas_call(
            _classifier_kernel,
            out_shape=jax.ShapeDtypeStruct((B_pad, n_tiles * tk), jnp.float32),
            grid_spec=pltpu.PrefetchScalarGridSpec(
                num_scalar_prefetch=0,
                grid=(n_tiles,),
                in_specs=[
                    pl.BlockSpec((B_pad, F_pad), lambda k: (0, 0)),   # after, resident
                    _spec((F_pad, tk), lambda k: (0, k),
                          3 if use_hints else None),                  # wcls, streamed
                ],
                out_specs=pl.BlockSpec((B_pad, tk), lambda k: (0, k)),
            ),
            compiler_params=pltpu.CompilerParams(
                dimension_semantics=("parallel",),
                vmem_limit_bytes=vmem_limit,
            ),
        )(after_bf16, wcls_t)

    try:
        score_p = call(True)
    except Exception:
        score_p = call(False)
    return after_p, score_p, before_p


def bnneck3_forward(x_nchw, w_red, bn_gamma, bn_beta, w_cls, *, split=None):
    """x_nchw: (B, C_in, 1, 1); w_red: (F, C_in); w_cls: (K, F). Returns f32 outputs."""
    B, C_in, H, W = x_nchw.shape
    assert H == 1 and W == 1, "BNNeck3 expects globally-pooled (H=W=1) input"
    F_dim = w_red.shape[0]
    K = w_cls.shape[0]
    # TODO(synk): batch_size == 1 gives var == 0 -> BN normalizes by sqrt(eps); torch's
    # BatchNorm1d raises in training mode for B == 1, there is no Pallas-side guard.

    if split is None:
        split = K >= SPLIT_CLASS_THRESHOLD

    # Padding for MXU / lane-dense layout.
    B_pad = _round_up(max(B, 16), 16)          # bf16 sublane packing
    C_pad = _round_up(C_in, 128)               # lane-dense contraction dim
    F_pad = _round_up(F_dim, 128)              # lane-dense before/after stores
    K128 = _round_up(K, 128)

    vmem_limit, budget = _vmem_limits()

    # Class-tile sizing against the per-generation VMEM budget (conservative buffer
    # counts: wcls triple-buffered bf16, score double-buffered f32, residents x2).
    per_col = 128 * (3 * F_pad * 2 + 2 * B_pad * 4)
    if split:
        fixed = 2 * B_pad * F_pad * 2 + (2 << 20)
        min_steps = 4                          # >= 2 tiles per TensorCore
    else:
        fixed = (2 * (B_pad * C_pad * 2 + C_pad * F_pad * 2 + 2 * F_pad * 4
                      + 2 * B_pad * F_pad * 4)
                 + B_pad * F_pad * 2 + (2 << 20))
        min_steps = 3                          # overlap step-0 conv+BN with the stream
    tk, n_tiles, K_pad = _choose_class_tile(K128, per_col, fixed, budget, min_steps)

    # Wrapper-side layout: bf16 MXU operands, f32 BN params, zero padding everywhere.
    x2d = jnp.pad(x_nchw.reshape(B, C_in).astype(jnp.bfloat16),
                  ((0, B_pad - B), (0, C_pad - C_in)))
    wred_t = jnp.pad(w_red.reshape(F_dim, C_in).T.astype(jnp.bfloat16),
                     ((0, C_pad - C_in), (0, F_pad - F_dim)))          # (C_pad, F_pad)
    gamma2d = jnp.pad(bn_gamma.astype(jnp.float32).reshape(1, F_dim),
                      ((0, 0), (0, F_pad - F_dim)))
    beta2d = jnp.pad(bn_beta.astype(jnp.float32).reshape(1, F_dim),
                     ((0, 0), (0, F_pad - F_dim)))
    wcls_t = jnp.pad(w_cls.T.astype(jnp.bfloat16),
                     ((0, F_pad - F_dim), (0, K_pad - K)))             # (F_pad, K_pad)

    run = _run_split if split else _run_fused
    after_p, score_p, before_p = run(x2d, wred_t, gamma2d, beta2d, wcls_t,
                                     B=B, tk=tk, n_tiles=n_tiles,
                                     vmem_limit=vmem_limit)
    return after_p[:B, :F_dim], score_p[:B, :K], before_p[:B, :F_dim]


# --------------------------------------------------------------------------- helpers

def init_params(key, input_dim, feat_dim, class_num):
    k_red, k_cls = jax.random.split(key)
    # Conv2d weight: kaiming_normal_, a=0, mode='fan_in' -> std = sqrt(2 / fan_in)
    fan_in = input_dim * 1 * 1
    w_red = jax.random.normal(k_red, (feat_dim, input_dim), jnp.float32) * jnp.sqrt(
        2.0 / fan_in)
    # BatchNorm1d: weight=1, bias=0 (bias frozen, value 0)
    bn_gamma = jnp.ones((feat_dim,), jnp.float32)
    bn_beta = jnp.zeros((feat_dim,), jnp.float32)
    # Linear classifier: normal std=0.001, no bias
    w_cls = jax.random.normal(k_cls, (class_num, feat_dim), jnp.float32) * 0.001
    return w_red, bn_gamma, bn_beta, w_cls


def _reference(x, w_red, bn_gamma, bn_beta, w_cls):
    # Plain-JAX reference with matching precision choices (bf16 MXU operands,
    # f32 accumulation, f32 BatchNorm math).
    B, C_in = x.shape[0], x.shape[1]
    xb = x.reshape(B, C_in).astype(jnp.bfloat16)
    wrb = w_red.T.astype(jnp.bfloat16)
    before = jnp.dot(xb, wrb, preferred_element_type=jnp.float32)
    mean = before.mean(axis=0, keepdims=True)
    var = ((before - mean) ** 2).mean(axis=0, keepdims=True)
    after = (before - mean) * lax.rsqrt(var + BN_EPS) * bn_gamma + bn_beta
    score = jnp.dot(after.astype(jnp.bfloat16), w_cls.T.astype(jnp.bfloat16),
                    preferred_element_type=jnp.float32)
    return after, score, before


if __name__ == "__main__":
    key = jax.random.PRNGKey(0)

    # Case 1: fused single-call path; exercises batch padding (8 -> 16), C_in padding
    #         (64 -> 128) and exact class padding (200 -> 256, two 128-col tiles).
    # Case 2: split path (conv+BN call, then "parallel" classifier call); exercises
    #         non-multiple feat/class dims and the multi-tile parallel class axis.
    cases = [
        dict(B=8, input_dim=64, feat_dim=128, class_num=200, split=False),
        dict(B=4, input_dim=96, feat_dim=192, class_num=520, split=True),
    ]
    for idx, c in enumerate(cases):
        key, k_x, k_p = jax.random.split(key, 3)
        x = jax.random.normal(k_x, (c["B"], c["input_dim"], 1, 1), jnp.float32)
        w_red, bn_gamma, bn_beta, w_cls = init_params(
            k_p, c["input_dim"], c["feat_dim"], c["class_num"])

        after_neck, score, before_neck = jax.block_until_ready(
            bnneck3_forward(x, w_red, bn_gamma, bn_beta, w_cls, split=c["split"]))

        after_ref, score_ref, before_ref = _reference(x, w_red, bn_gamma, bn_beta,
                                                      w_cls)

        assert before_neck.shape == (c["B"], c["feat_dim"]), idx
        assert after_neck.shape == (c["B"], c["feat_dim"]), idx
        assert score.shape == (c["B"], c["class_num"]), idx
        assert jnp.allclose(before_neck, before_ref, atol=1e-2, rtol=1e-2), idx
        assert jnp.allclose(after_neck, after_ref, atol=1e-2, rtol=1e-2), idx
        assert jnp.allclose(score, score_ref, atol=1e-2, rtol=1e-2), idx

    print("KERNEL_OK")
</pallas_src>

<mosaic_0001>
module attributes {stable_mosaic.version = 11 : i64} {
  func.func @_fused_kernel(%arg0: i32, %arg1: memref<16x128xbf16, #tpu.memory_space<vmem>>, %arg2: memref<128x128xbf16, #tpu.memory_space<vmem>>, %arg3: memref<1x128xf32, #tpu.memory_space<vmem>>, %arg4: memref<1x128xf32, #tpu.memory_space<vmem>>, %arg5: memref<128x128xbf16, #tpu.memory_space<vmem>>, %arg6: memref<16x128xf32, #tpu.memory_space<vmem>>, %arg7: memref<16x128xf32, #tpu.memory_space<vmem>>, %arg8: memref<16x128xf32, #tpu.memory_space<vmem>>, %arg9: memref<16x128xbf16, #tpu.memory_space<vmem>>) attributes {dimension_semantics = [#tpu.dimension_semantics<arbitrary>], iteration_bounds = array<i64: 2>, scalar_prefetch = 0 : i64, scratch_operands = 1 : i64, tpu.core_type = #tpu.core_type<tc>, window_params = [{pipeline_mode = #tpu.pipeline_mode<synchronous>, transform_indices = @transform_0, window_bounds = array<i64: 16, 128>}, {pipeline_mode = #tpu.pipeline_mode<synchronous>, transform_indices = @transform_1, window_bounds = array<i64: 128, 128>}, {pipeline_mode = #tpu.pipeline_mode<synchronous>, transform_indices = @transform_2, window_bounds = array<i64: 1, 128>}, {pipeline_mode = #tpu.pipeline_mode<synchronous>, transform_indices = @transform_3, window_bounds = array<i64: 1, 128>}, {transform_indices = @transform_4, window_bounds = array<i64: 128, 128>}, {pipeline_mode = #tpu.pipeline_mode<synchronous>, transform_indices = @transform_5, window_bounds = array<i64: 16, 128>}, {transform_indices = @transform_6, window_bounds = array<i64: 16, 128>}, {pipeline_mode = #tpu.pipeline_mode<synchronous>, transform_indices = @transform_7, window_bounds = array<i64: 16, 128>}]} {
    %c0_i32 = arith.constant 0 : i32
    %0 = arith.cmpi eq, %arg0, %c0_i32 : i32
    %1 = arith.extui %0 : i1 to i32
    %c0_i32_0 = arith.constant 0 : i32
    %2 = arith.cmpi ne, %1, %c0_i32_0 : i32
    scf.if %2 {
      %c0_6 = arith.constant 0 : index
      %c0_7 = arith.constant 0 : index
      %7 = vector.load %arg1[%c0_6, %c0_7] : memref<16x128xbf16, #tpu.memory_space<vmem>>, vector<16x128xbf16>
      %c0_8 = arith.constant 0 : index
      %c0_9 = arith.constant 0 : index
      %8 = vector.load %arg2[%c0_8, %c0_9] : memref<128x128xbf16, #tpu.memory_space<vmem>>, vector<128x128xbf16>
      %cst_10 = arith.constant dense<0.000000e+00> : vector<16x128xf32>
      %9 = tpu.matmul %7, %8, %cst_10 {dimension_numbers = #tpu.dot_dimension_numbers<[1], [0], [0], [1], [0, 0, 1, 1], [], []>} : vector<16x128xbf16>, vector<128x128xbf16>, vector<16x128xf32> -> vector<16x128xf32>
      %c0_11 = arith.constant 0 : index
      %c0_12 = arith.constant 0 : index
      %10 = vector.load %arg8[%c0_11, %c0_12] : memref<16x128xf32, #tpu.memory_space<vmem>>, vector<16x128xf32>
      tpu.vector_store %arg8[%c0_11, %c0_12], %9 {strides = array<i32>} : memref<16x128xf32, #tpu.memory_space<vmem>>, vector<16x128xf32>,
      %cst_13 = arith.constant dense<0.000000e+00> : vector<128xf32>
      %11 = vector.multi_reduction <add>, %9, %cst_13 [0] : vector<16x128xf32> to vector<128xf32>
      %12 = vector.shape_cast %11 : vector<128xf32> to vector<1x128xf32>
      %cst_14 = arith.constant 1.250000e-01 : f32
      %13 = vector.broadcast %cst_14 : f32 to vector<1x128xf32>
      %14 = arith.mulf %12, %13 : vector<1x128xf32>
      %15 = arith.mulf %9, %9 : vector<16x128xf32>
      %cst_15 = arith.constant dense<0.000000e+00> : vector<128xf32>
      %16 = vector.multi_reduction <add>, %15, %cst_15 [0] : vector<16x128xf32> to vector<128xf32>
      %17 = vector.shape_cast %16 : vector<128xf32> to vector<1x128xf32>
      %cst_16 = arith.constant 1.250000e-01 : f32
      %18 = vector.broadcast %cst_16 : f32 to vector<1x128xf32>
      %19 = arith.mulf %17, %18 : vector<1x128xf32>
      %20 = arith.mulf %14, %14 : vector<1x128xf32>
      %21 = arith.subf %19, %20 : vector<1x128xf32>
      %cst_17 = arith.constant 9.99999974E-6 : f32
      %22 = vector.broadcast %cst_17 : f32 to vector<1x128xf32>
      %23 = arith.addf %21, %22 : vector<1x128xf32>
      %24 = math.rsqrt %23 : vector<1x128xf32>
      %c0_18 = arith.constant 0 : index
      %c0_19 = arith.constant 0 : index
      %25 = vector.load %arg3[%c0_18, %c0_19] : memref<1x128xf32, #tpu.memory_space<vmem>>, vector<1x128xf32>
      %26 = arith.mulf %24, %25 : vector<1x128xf32>
      %c0_20 = arith.constant 0 : index
      %c0_21 = arith.constant 0 : index
      %27 = vector.load %arg4[%c0_20, %c0_21] : memref<1x128xf32, #tpu.memory_space<vmem>>, vector<1x128xf32>
      %28 = arith.mulf %14, %26 : vector<1x128xf32>
      %29 = arith.subf %27, %28 : vector<1x128xf32>
      %30 = vector.broadcast %26 : vector<1x128xf32> to vector<16x128xf32>
      %31 = arith.mulf %9, %30 : vector<16x128xf32>
      %32 = vector.broadcast %29 : vector<1x128xf32> to vector<16x128xf32>
      %33 = arith.addf %31, %32 : vector<16x128xf32>
      %c0_22 = arith.constant 0 : index
      %c0_23 = arith.constant 0 : index
      %34 = vector.load %arg6[%c0_22, %c0_23] : memref<16x128xf32, #tpu.memory_space<vmem>>, vector<16x128xf32>
      tpu.vector_store %arg6[%c0_22, %c0_23], %33 {strides = array<i32>} : memref<16x128xf32, #tpu.memory_space<vmem>>, vector<16x128xf32>,
      %35 = arith.truncf %33 : vector<16x128xf32> to vector<16x128xbf16>
      %c0_24 = arith.constant 0 : index
      %c0_25 = arith.constant 0 : index
      %36 = vector.load %arg9[%c0_24, %c0_25] : memref<16x128xbf16, #tpu.memory_space<vmem>>, vector<16x128xbf16>
      tpu.vector_store %arg9[%c0_24, %c0_25], %35 {strides = array<i32>} : memref<16x128xbf16, #tpu.memory_space<vmem>>, vector<16x128xbf16>,
    } else {
    }
    %c0 = arith.constant 0 : index
    %c0_1 = arith.constant 0 : index
    %3 = vector.load %arg9[%c0, %c0_1] : memref<16x128xbf16, #tpu.memory_space<vmem>>, vector<16x128xbf16>
    %c0_2 = arith.constant 0 : index
    %c0_3 = arith.constant 0 : index
    %4 = vector.load %arg5[%c0_2, %c0_3] : memref<128x128xbf16, #tpu.memory_space<vmem>>, vector<128x128xbf16>
    %cst = arith.constant dense<0.000000e+00> : vector<16x128xf32>
    %5 = tpu.matmul %3, %4, %cst {dimension_numbers = #tpu.dot_dimension_numbers<[1], [0], [0], [1], [0, 0, 1, 1], [], []>} : vector<16x128xbf16>, vector<128x128xbf16>, vector<16x128xf32> -> vector<16x128xf32>
    %c0_4 = arith.constant 0 : index
    %c0_5 = arith.constant 0 : index
    %6 = vector.load %arg7[%c0_4, %c0_5] : memref<16x128xf32, #tpu.memory_space<vmem>>, vector<16x128xf32>
    tpu.vector_store %arg7[%c0_4, %c0_5], %5 {strides = array<i32>} : memref<16x128xf32, #tpu.memory_space<vmem>>, vector<16x128xf32>,
    return
  }
  func.func @transform_0(%arg0: i32) -> (i32, i32) {
    %c0_i32 = arith.constant 0 : i32
    %c0_i32_0 = arith.constant 0 : i32
    %c0_i32_1 = arith.constant 0 : i32
    return %c0_i32, %c0_i32_0 : i32, i32
  }
  func.func @transform_1(%arg0: i32) -> (i32, i32) {
    %c0_i32 = arith.constant 0 : i32
    %c0_i32_0 = arith.constant 0 : i32
    %c0_i32_1 = arith.constant 0 : i32
    return %c0_i32, %c0_i32_0 : i32, i32
  }
  func.func @transform_2(%arg0: i32) -> (i32, i32) {
    %c0_i32 = arith.constant 0 : i32
    %c0_i32_0 = arith.constant 0 : i32
    %c0_i32_1 = arith.constant 0 : i32
    return %c0_i32, %c0_i32_0 : i32, i32
  }
  func.func @transform_3(%arg0: i32) -> (i32, i32) {
    %c0_i32 = arith.constant 0 : i32
    %c0_i32_0 = arith.constant 0 : i32
    %c0_i32_1 = arith.constant 0 : i32
    return %c0_i32, %c0_i32_0 : i32, i32
  }
  func.func @transform_4(%arg0: i32) -> (i32, i32) {
    %c0_i32 = arith.constant 0 : i32
    %c0_i32_0 = arith.constant 0 : i32
    return %c0_i32, %arg0 : i32, i32
  }
  func.func @transform_5(%arg0: i32) -> (i32, i32) {
    %c0_i32 = arith.constant 0 : i32
    %c0_i32_0 = arith.constant 0 : i32
    %c0_i32_1 = arith.constant 0 : i32
    return %c0_i32, %c0_i32_0 : i32, i32
  }
  func.func @transform_6(%arg0: i32) -> (i32, i32) {
    %c0_i32 = arith.constant 0 : i32
    %c0_i32_0 = arith.constant 0 : i32
    return %c0_i32, %arg0 : i32, i32
  }
  func.func @transform_7(%arg0: i32) -> (i32, i32) {
    %c0_i32 = arith.constant 0 : i32
    %c0_i32_0 = arith.constant 0 : i32
    %c0_i32_1 = arith.constant 0 : i32
    return %c0_i32, %c0_i32_0 : i32, i32
  }
}

</mosaic_0001>

<llo_original>
// kernel: tpu_custom_call.1
$region0: #{tpu_custom_call.1}
  #allocation0 [shape = 'u32[]', space=smem, size = 0x4, offset = 0x4, fixed_abs, tag = 'smem constant byte address 0x4 - core index']
  #allocation1 [shape = 'u32[144,128]{1,0:T(1,128)}', space=vmem, size = 0x12000, scoped, tag = 'internal scratch']
  #allocation2 [shape = 'bf16[16,128]{1,0:T(8,128)(2,1)}', space=vmem, size = 0x1000, scoped, tag = 'scratch operand']
  %s0 = inlined_call_operand.hbm [shape: bf16[16,128], index: 0, kind: input, shape index: {}]
  %s1 = inlined_call_operand.hbm [shape: bf16[128,128], index: 1, kind: input, shape index: {}]
  %s2 = inlined_call_operand.vmem [shape: f32[1,128], index: 2, kind: input, shape index: {}]
  %s3 = inlined_call_operand.vmem [shape: f32[1,128], index: 3, kind: input, shape index: {}]
  %s4 = inlined_call_operand.hbm [shape: bf16[128,256], index: 4, kind: input, shape index: {}]
  %s5 = inlined_call_operand.hbm [shape: f32[16,128], index: 5, kind: output, shape index: {0}]
  %s6 = inlined_call_operand.hbm [shape: f32[16,256], index: 6, kind: output, shape index: {1}]
  %s7 = inlined_call_operand.hbm [shape: f32[16,128], index: 7, kind: output, shape index: {2}]
  %8 = xla_tuple %s5, %s6, %s7
  %s9 = sld [smem:[#allocation0]]
  $region85: #{tpu_custom_call.1} parent=0
    _
  %s11 = ssub.s32 1, %s9
  %s12 = scalar_select 0, %s11, %s9
  $region1: #{tpu_custom_call.1} parent=0
    #allocation3 [shape = 'u8[4096]{0}', space=vmem, size = 0x1000, scoped, tag = 'input window, operand 0, single buffered']
    #allocation4 [shape = 's32[2]{0}', space=sflag, size = 0x8, scoped, tag = 'scoped memory for tpu_custom_call.1']
    #allocation5 [shape = 's32[2]{0}', space=sflag, size = 0x8, scoped, tag = 'scoped memory for tpu_custom_call.1']
    #allocation6 [shape = 'u8[32768]{0}', space=vmem, size = 0x8000, scoped, tag = 'input window, operand 1, single buffered']
    #allocation7 [shape = 's32[1]{0}', space=sflag, size = 0x4, scoped, tag = 'scoped memory for tpu_custom_call.1']
    #allocation8 [shape = 'u8[65536]{0}', space=vmem, size = 0x10000, scoped, tag = 'input window, operand 4']
    #allocation9 [shape = 'u8[8192]{0}', space=vmem, size = 0x2000, scoped, tag = 'output window, operand 0, single buffered']
    #allocation10 [shape = 'u8[16384]{0}', space=vmem, size = 0x4000, scoped, tag = 'output window, operand 1']
    #allocation11 [shape = 's32[2]{0}', space=sflag, size = 0x8, scoped, tag = 'scoped memory for tpu_custom_call.1']
    #allocation12 [shape = 'u8[8192]{0}', space=vmem, size = 0x2000, scoped, tag = 'output window, operand 2, single buffered']
    %13 = vsyncpa [#allocation4], 0
    %14 = vsyncpa [#allocation7], 0
    %15 = vsyncpa [#allocation5], 0
    %16 = vsyncpa [#allocation11], 0
    %s17 = scalar_lea.sflag [#allocation11], 1
    %18 = vsyncpa %s17, 0
    loop: start=0, step=1, limit=4
    $region2: #{tpu_custom_call.1} parent=1 // loop_pre_header
      _
    $region3: #{tpu_custom_call.1} parent=1 // loop_header
      %s20 = sphi 0, %s24
      %p21 = scmp.ge.s32.totalorder %s20, 4
      %s28 = sphi 0, %s28
      %s30 = sphi 0, %s28
      %s31 = sphi 0, %s30
      %s45 = sphi 0, %s31
      %s49 = sphi 0, %s49
      %s51 = sphi 0, %s49
      %s52 = sphi 0, %s51
      %s66 = sphi 0, %s52
      %s70 = sphi 0, %s70
      %s72 = sphi 0, %s70
      %s73 = sphi 0, %s72
      %s87 = sphi 0, %s73
      %s91 = sphi 0, %s91
      %s93 = sphi 0, %s91
      %s94 = sphi 0, %s93
      %s108 = sphi 0, %s94
      %s114 = sphi 0, %s116
      %s117 = sphi 0, %s114
      %s118 = sphi 0, %s117
      %s134 = sphi 0, %s118
      %s138 = sphi 0, %s138
      %s140 = sphi 0, %s138
      %s141 = sphi 0, %s140
      %s155 = sphi 0, %s141
      %s161 = sphi 0, %s163
      %s164 = sphi 0, %s161
      %s165 = sphi 0, %s164
      %s181 = sphi 0, %s165
      %s185 = sphi 0, %s185
      %s187 = sphi 0, %s185
      %s188 = sphi 0, %s187
      %s202 = sphi 0, %s188
    $region4: #{tpu_custom_call.1} parent=1 // loop_header_branch
      %23 = sbr.rel (%p21) target = $region8
    $region5: #{tpu_custom_call.1} parent=1 // loop_body
      %s25 = ssub.s32 %s20, 1
      %s26 = ssub.s32 %s20, 2
      %s27 = sadd.s32 %s20, 1
      %s29 = sadd.s32 %s28, 1
      %p32 = scmp.eq.s32.totalorder %s20, 1
      %p33 = scmp.ne.s32.totalorder %s28, %s30
      %p34 = scmp.eq.s32.totalorder %s20, 0
      %p35 = por %p33, %p34
      %p36 = scmp.ne.s32.totalorder %s28, %s30
      %p37 = scmp.eq.s32.totalorder %s25, 1
      %p38 = por %p36, %p37
      %p39 = scmp.ne.s32.totalorder %s30, %s31
      %p40 = scmp.eq.s32.totalorder %s25, 0
      %p41 = por %p39, %p40
      %p42 = scmp.ne.s32.totalorder %s30, %s31
      %p43 = scmp.eq.s32.totalorder %s26, 1
      %p44 = por %p42, %p43
      %p46 = scmp.ne.s32.totalorder %s31, %s45
      %p47 = scmp.eq.s32.totalorder %s26, 0
      %p48 = por %p46, %p47
      %s50 = sadd.s32 %s49, 1
      %p53 = scmp.eq.s32.totalorder %s20, 1
      %p54 = scmp.ne.s32.totalorder %s49, %s51
      %p55 = scmp.eq.s32.totalorder %s20, 0
      %p56 = por %p54, %p55
      %p57 = scmp.ne.s32.totalorder %s49, %s51
      %p58 = scmp.eq.s32.totalorder %s25, 1
      %p59 = por %p57, %p58
      %p60 = scmp.ne.s32.totalorder %s51, %s52
      %p61 = scmp.eq.s32.totalorder %s25, 0
      %p62 = por %p60, %p61
      %p63 = scmp.ne.s32.totalorder %s51, %s52
      %p64 = scmp.eq.s32.totalorder %s26, 1
      %p65 = por %p63, %p64
      %p67 = scmp.ne.s32.totalorder %s52, %s66
      %p68 = scmp.eq.s32.totalorder %s26, 0
      %p69 = por %p67, %p68
      %s71 = sadd.s32 %s70, 1
      %p74 = scmp.eq.s32.totalorder %s20, 1
      %p75 = scmp.ne.s32.totalorder %s70, %s72
      %p76 = scmp.eq.s32.totalorder %s20, 0
      %p77 = por %p75, %p76
      %p78 = scmp.ne.s32.totalorder %s70, %s72
      %p79 = scmp.eq.s32.totalorder %s25, 1
      %p80 = por %p78, %p79
      %p81 = scmp.ne.s32.totalorder %s72, %s73
      %p82 = scmp.eq.s32.totalorder %s25, 0
      %p83 = por %p81, %p82
      %p84 = scmp.ne.s32.totalorder %s72, %s73
      %p85 = scmp.eq.s32.totalorder %s26, 1
      %p86 = por %p84, %p85
      %p88 = scmp.ne.s32.totalorder %s73, %s87
      %p89 = scmp.eq.s32.totalorder %s26, 0
      %p90 = por %p88, %p89
      %s92 = sadd.s32 %s91, 1
      %p95 = scmp.eq.s32.totalorder %s20, 1
      %p96 = scmp.ne.s32.totalorder %s91, %s93
      %p97 = scmp.eq.s32.totalorder %s20, 0
      %p98 = por %p96, %p97
      %p99 = scmp.ne.s32.totalorder %s91, %s93
      %p100 = scmp.eq.s32.totalorder %s25, 1
      %p101 = por %p99, %p100
      %p102 = scmp.ne.s32.totalorder %s93, %s94
      %p103 = scmp.eq.s32.totalorder %s25, 0
      %p104 = por %p102, %p103
      %p105 = scmp.ne.s32.totalorder %s93, %s94
      %p106 = scmp.eq.s32.totalorder %s26, 1
      %p107 = por %p105, %p106
      %p109 = scmp.ne.s32.totalorder %s94, %s108
      %p110 = scmp.eq.s32.totalorder %s26, 0
      %p111 = por %p109, %p110
      %s112 = ssub.s32 %s20, %s27
      %p113 = scmp.eq.s32.totalorder %s112, 0
      %s115 = sadd.s32 %s114, 1
      %s116 = scalar_select %p113, %s114, %s115
      %p119 = pneg %p113
      %p120 = scmp.eq.s32.totalorder %s20, 1
      %p121 = por %p119, %p120
      %p122 = scmp.ne.s32.totalorder %s114, %s117
      %p123 = scmp.eq.s32.totalorder %s20, 0
      %p124 = por %p122, %p123
      %p125 = scmp.ne.s32.totalorder %s114, %s117
      %p126 = scmp.eq.s32.totalorder %s25, 1
      %p127 = por %p125, %p126
      %p128 = scmp.ne.s32.totalorder %s117, %s118
      %p129 = scmp.eq.s32.totalorder %s25, 0
      %p130 = por %p128, %p129
      %p131 = scmp.ne.s32.totalorder %s117, %s118
      %p132 = scmp.eq.s32.totalorder %s26, 1
      %p133 = por %p131, %p132
      %p135 = scmp.ne.s32.totalorder %s118, %s134
      %p136 = scmp.eq.s32.totalorder %s26, 0
      %p137 = por %p135, %p136
      %s139 = sadd.s32 %s138, 1
      %p142 = scmp.eq.s32.totalorder %s20, 1
      %p143 = scmp.ne.s32.totalorder %s138, %s140
      %p144 = scmp.eq.s32.totalorder %s20, 0
      %p145 = por %p143, %p144
      %p146 = scmp.ne.s32.totalorder %s138, %s140
      %p147 = scmp.eq.s32.totalorder %s25, 1
      %p148 = por %p146, %p147
      %p149 = scmp.ne.s32.totalorder %s140, %s141
      %p150 = scmp.eq.s32.totalorder %s25, 0
      %p151 = por %p149, %p150
      %p152 = scmp.ne.s32.totalorder %s140, %s141
      %p153 = scmp.eq.s32.totalorder %s26, 1
      %p154 = por %p152, %p153
      %p156 = scmp.ne.s32.totalorder %s141, %s155
      %p157 = scmp.eq.s32.totalorder %s26, 0
      %p158 = por %p156, %p157
      %s159 = ssub.s32 %s20, %s27
      %p160 = scmp.eq.s32.totalorder %s159, 0
      %s162 = sadd.s32 %s161, 1
      %s163 = scalar_select %p160, %s161, %s162
      %p166 = pneg %p160
      %p167 = scmp.eq.s32.totalorder %s20, 1
      %p168 = por %p166, %p167
      %p169 = scmp.ne.s32.totalorder %s161, %s164
      %p170 = scmp.eq.s32.totalorder %s20, 0
      %p171 = por %p169, %p170
      %p172 = scmp.ne.s32.totalorder %s161, %s164
      %p173 = scmp.eq.s32.totalorder %s25, 1
      %p174 = por %p172, %p173
      %p175 = scmp.ne.s32.totalorder %s164, %s165
      %p176 = scmp.eq.s32.totalorder %s25, 0
      %p177 = por %p175, %p176
      %p178 = scmp.ne.s32.totalorder %s164, %s165
      %p179 = scmp.eq.s32.totalorder %s26, 1
      %p180 = por %p178, %p179
      %p182 = scmp.ne.s32.totalorder %s165, %s181
      %p183 = scmp.eq.s32.totalorder %s26, 0
      %p184 = por %p182, %p183
      %s186 = sadd.s32 %s185, 1
      %p189 = scmp.eq.s32.totalorder %s20, 1
      %p190 = scmp.ne.s32.totalorder %s185, %s187
      %p191 = scmp.eq.s32.totalorder %s20, 0
      %p192 = por %p190, %p191
      %p193 = scmp.ne.s32.totalorder %s185, %s187
      %p194 = scmp.eq.s32.totalorder %s25, 1
      %p195 = por %p193, %p194
      %p196 = scmp.ne.s32.totalorder %s187, %s188
      %p197 = scmp.eq.s32.totalorder %s25, 0
      %p198 = por %p196, %p197
      %p199 = scmp.ne.s32.totalorder %s187, %s188
      %p200 = scmp.eq.s32.totalorder %s26, 1
      %p201 = por %p199, %p200
      %p203 = scmp.ne.s32.totalorder %s188, %s202
      %p204 = scmp.eq.s32.totalorder %s26, 0
      %p205 = por %p203, %p204
      %p206 = scmp.le.s32.totalorder 1, %s20
      %p207 = scmp.lt.s32.totalorder %s20, 3
      %p208 = pnand %p206, %p207
      %p209 = pneg %p208
      // Predicated region
      $region9: #{tpu_custom_call.1} parent=5 // pred_check
        _
      $region10: #{tpu_custom_call.1} parent=5 // pred_check_branch
        %211 = sbr.rel (%p208) target = $region12
      $region11: #{tpu_custom_call.1} parent=5 // pred_region
        %s212 = ssub.s32 %s20, 1
        // Predicated region
        $region13: #{tpu_custom_call.1} parent=11 // pred_check
          %p213 = pneg %p41
        $region14: #{tpu_custom_call.1} parent=11 // pred_check_branch
          %215 = sbr.rel (%p213) target = $region16
        $region15: #{tpu_custom_call.1} parent=11 // pred_region
          %s217 = ssub.s32 128, 128
          %218 = vsyncadd [#allocation4], %s217
          %s219 = sshll.u32 [#allocation3], 4
          %s220 = int_to_ptr.vmem [resolvable:$true] %s219
          %225 = dma.hbm_to_vmem [thread:$0]  %s0, 128, %s220, [#allocation4], 64, 64, 4
        $region16: #{tpu_custom_call.1} parent=11 // pred_fallthru
          _
        // Predicated region
        $region17: #{tpu_custom_call.1} parent=11 // pred_check
          %p226 = pneg %p62
        $region18: #{tpu_custom_call.1} parent=11 // pred_check_branch
          %228 = sbr.rel (%p226) target = $region20
        $region19: #{tpu_custom_call.1} parent=11 // pred_region
          %s230 = ssub.s32 1024, 1024
          %231 = vsyncadd [#allocation7], %s230
          %s232 = sshll.u32 [#allocation6], 4
          %s233 = int_to_ptr.vmem [resolvable:$true] %s232
          %238 = dma.hbm_to_vmem [thread:$0]  %s1, 1024, %s233, [#allocation7], 64, 64, 4
        $region20: #{tpu_custom_call.1} parent=11 // pred_fallthru
          _
        // Predicated region
        $region21: #{tpu_custom_call.1} parent=11 // pred_check
          %p239 = pneg %p83
        $region22: #{tpu_custom_call.1} parent=11 // pred_check_branch
          %241 = sbr.rel (%p239) target = $region24
        $region23: #{tpu_custom_call.1} parent=11 // pred_region
          _
        $region24: #{tpu_custom_call.1} parent=11 // pred_fallthru
          _
        // Predicated region
        $region25: #{tpu_custom_call.1} parent=11 // pred_check
          %p242 = pneg %p104
        $region26: #{tpu_custom_call.1} parent=11 // pred_check_branch
          %244 = sbr.rel (%p242) target = $region28
        $region27: #{tpu_custom_call.1} parent=11 // pred_region
          _
        $region28: #{tpu_custom_call.1} parent=11 // pred_fallthru
          _
      $region12: #{tpu_custom_call.1} parent=5 // pred_fallthru
        _
      %p245 = scmp.lt.s32.totalorder %s20, 2
      // Predicated region
      $region29: #{tpu_custom_call.1} parent=5 // pred_check
        %p246 = pneg %p245
      $region30: #{tpu_custom_call.1} parent=5 // pred_check_branch
        %248 = sbr.rel (%p246) target = $region32
      $region31: #{tpu_custom_call.1} parent=5 // pred_region
        // Predicated region
        $region33: #{tpu_custom_call.1} parent=31 // pred_check
          %p249 = pneg %p124
        $region34: #{tpu_custom_call.1} parent=31 // pred_check_branch
          %251 = sbr.rel (%p249) target = $region36
        $region35: #{tpu_custom_call.1} parent=31 // pred_region
          %s252 = sand.u32 %s20, 1
          %s253 = scalar_lea.sflag [#allocation4], %s252
          %s254 = sand.u32 %s114, 1
          %s255 = smul.addr %s254, 64
          %s256 = scalar_lea.vmem [#allocation8], %s255
          %s258 = ssub.s32 1024, 1024
          %259 = vsyncadd %s253, %s258
          %s260 = smul.addr %s20, 64
          %s261 = scalar_lea.hbm %s4, %s260
          %s262 = sshll.u32 %s256, 4
          %s263 = int_to_ptr.vmem [resolvable:$true] %s262
          %268 = dma.hbm_to_vmem [thread:$0]  %s261, 1024, %s263, %s253, 128, 64, 4
        $region36: #{tpu_custom_call.1} parent=31 // pred_fallthru
          _
      $region32: #{tpu_custom_call.1} parent=5 // pred_fallthru
        _
      %p269 = scmp.le.s32.totalorder 1, %s20
      %p270 = scmp.lt.s32.totalorder %s20, 3
      %p271 = pnand %p269, %p270
      %p272 = pneg %p271
      // Predicated region
      $region37: #{tpu_custom_call.1} parent=5 // pred_check
        _
      $region38: #{tpu_custom_call.1} parent=5 // pred_check_branch
        %274 = sbr.rel (%p271) target = $region40
      $region39: #{tpu_custom_call.1} parent=5 // pred_region
        %s275 = ssub.s32 %s20, 1
        // Predicated region
        $region41: #{tpu_custom_call.1} parent=39 // pred_check
          %p276 = pneg %p41
        $region42: #{tpu_custom_call.1} parent=39 // pred_check_branch
          %278 = sbr.rel (%p276) target = $region44
        $region43: #{tpu_custom_call.1} parent=39 // pred_region
          %279 = dma.done [#allocation4], 128
        $region44: #{tpu_custom_call.1} parent=39 // pred_fallthru
          _
        // Predicated region
        $region45: #{tpu_custom_call.1} parent=39 // pred_check
          %p280 = pneg %p62
        $region46: #{tpu_custom_call.1} parent=39 // pred_check_branch
          %282 = sbr.rel (%p280) target = $region48
        $region47: #{tpu_custom_call.1} parent=39 // pred_region
          %283 = dma.done [#allocation7], 1024
        $region48: #{tpu_custom_call.1} parent=39 // pred_fallthru
          _
        %s284 = sand.u32 %s25, 1
        %s285 = scalar_lea.sflag [#allocation4], %s284
        %s286 = sand.u32 %s117, 1
        %s287 = smul.addr %s286, 64
        %s288 = scalar_lea.vmem [#allocation8], %s287
        // Predicated region
        $region49: #{tpu_custom_call.1} parent=39 // pred_check
          %p289 = pneg %p130
        $region50: #{tpu_custom_call.1} parent=39 // pred_check_branch
          %291 = sbr.rel (%p289) target = $region52
        $region51: #{tpu_custom_call.1} parent=39 // pred_region
          %292 = dma.done %s285, 1024
        $region52: #{tpu_custom_call.1} parent=39 // pred_fallthru
          _
        %p293 = pneg %p41
        %p294 = pneg %p38
        %p295 = pneg %p62
        %p296 = pneg %p59
        %p297 = pneg %p83
        %p298 = pneg %p80
        %p299 = pneg %p104
        %p300 = pneg %p101
        %s301 = sand.u32 %s25, 1
        %s302 = scalar_lea.sflag [#allocation4], %s301
        %s303 = sand.u32 %s117, 1
        %s304 = smul.addr %s303, 64
        %s305 = scalar_lea.vmem [#allocation8], %s304
        %p306 = pneg %p130
        %p307 = pneg %p127
        %p308 = pneg %p151
        %p309 = pneg %p148
        %p310 = pneg %p177
        %p311 = pneg %p174
        %s312 = sand.u32 %s25, 1
        %s313 = scalar_lea.sflag [#allocation11], %s312
        %s314 = sand.u32 %s164, 1
        %s315 = smul.addr %s314, 16
        %s316 = scalar_lea.vmem [#allocation10], %s315
        %p317 = pneg %p198
        %p318 = pneg %p195
        %p320 = scmp.eq.s32.totalorder %s25, 0
        // Predicated region
        $region53: #{tpu_custom_call.1} parent=39 // pred_check
          %p321 = pneg %p320
        $region54: #{tpu_custom_call.1} parent=39 // pred_check_branch
          %323 = sbr.rel (%p321) target = $region56
        $region55: #{tpu_custom_call.1} parent=39 // pred_region
          %v324 = vld [vmem:[#allocation3] sm:$0xf]
          %v325 = vld [vmem:[#allocation3 + $0x4] sm:$0xf]
          %v326 = vld [vmem:[#allocation6] sm:$0xf]
          %v327 = vld [vmem:[#allocation6 + $0x4] sm:$0xf]
          %v328 = vld [vmem:[#allocation6 + $0x8] sm:$0xf]
          %v329 = vld [vmem:[#allocation6 + $0xc] sm:$0xf]
          %v330 = vld [vmem:[#allocation6 + $0x10] sm:$0xf]
          %v331 = vld [vmem:[#allocation6 + $0x14] sm:$0xf]
          %v332 = vld [vmem:[#allocation6 + $0x18] sm:$0xf]
          %v333 = vld [vmem:[#allocation6 + $0x1c] sm:$0xf]
          %v334 = vld [vmem:[#allocation6 + $0x20] sm:$0xf]
          %v335 = vld [vmem:[#allocation6 + $0x24] sm:$0xf]
          %v336 = vld [vmem:[#allocation6 + $0x28] sm:$0xf]
          %v337 = vld [vmem:[#allocation6 + $0x2c] sm:$0xf]
          %v338 = vld [vmem:[#allocation6 + $0x30] sm:$0xf]
          %v339 = vld [vmem:[#allocation6 + $0x34] sm:$0xf]
          %v340 = vld [vmem:[#allocation6 + $0x38] sm:$0xf]
          %v341 = vld [vmem:[#allocation6 + $0x3c] sm:$0xf]
          %v344 = vunpack.c.l.b16 %v324
          %v345 = vunpack.c.l.b16 %v325
          %v346 = vpack.c.b16 %v345, %v344
          %v364 = vunpack.c.l.b16 %v326
          %v365 = vunpack.c.l.b16 %v327
          %v366 = vunpack.c.l.b16 %v328
          %v367 = vunpack.c.l.b16 %v329
          %v368 = vunpack.c.l.b16 %v330
          %v369 = vunpack.c.l.b16 %v331
          %v370 = vunpack.c.l.b16 %v332
          %v371 = vunpack.c.l.b16 %v333
          %v372 = vunpack.c.l.b16 %v334
          %v373 = vunpack.c.l.b16 %v335
          %v374 = vunpack.c.l.b16 %v336
          %v375 = vunpack.c.l.b16 %v337
          %v376 = vunpack.c.l.b16 %v338
          %v377 = vunpack.c.l.b16 %v339
          %v378 = vunpack.c.l.b16 %v340
          %v379 = vunpack.c.l.b16 %v341
          %v380 = vpack.c.b16 %v365, %v364
          %v381 = vpack.c.b16 %v367, %v366
          %v382 = vpack.c.b16 %v369, %v368
          %v383 = vpack.c.b16 %v371, %v370
          %v384 = vpack.c.b16 %v373, %v372
          %v385 = vpack.c.b16 %v375, %v374
          %v386 = vpack.c.b16 %v377, %v376
          %v387 = vpack.c.b16 %v379, %v378
          %396 = vmatprep.subr.bf16.mxu0 0
          %397 = vmatpush1.bf16.msra.mxu0 %v387
          %398 = vmatprep.subr.bf16.mxu0 0
          %399 = vmatpush1.bf16.msra.mxu0 %v386
          %400 = vmatprep.subr.bf16.mxu0 0
          %401 = vmatpush1.bf16.msra.mxu0 %v385
          %402 = vmatprep.subr.bf16.mxu0 0
          %403 = vmatpush1.bf16.msra.mxu0 %v384
          %404 = vmatprep.subr.bf16.mxu0 0
          %405 = vmatpush1.bf16.msra.mxu0 %v383
          %406 = vmatprep.subr.bf16.mxu0 0
          %407 = vmatpush1.bf16.msra.mxu0 %v382
          %408 = vmatprep.subr.bf16.mxu0 0
          %409 = vmatpush1.bf16.msra.mxu0 %v381
          %410 = vmatprep.subr.bf16.mxu0 0
          %411 = vmatpush1.bf16.msra.mxu0 %v380
          %412 = vmatprep.subr.bf16.mxu0 0
          %413 = vmatpush2.bf16.msra.mxu0 0
          %414 = vmatprep.subr.bf16.mxu0 0
          %415 = vmatpush2.bf16.msra.mxu0 0
          %416 = vmatprep.subr.bf16.mxu0 0
          %417 = vmatpush2.bf16.msra.mxu0 0
          %418 = vmatprep.subr.bf16.mxu0 0
          %419 = vmatpush2.bf16.msra.mxu0 0
          %420 = vmatprep.subr.bf16.mxu0 0
          %421 = vmatpush2.bf16.msra.mxu0 0
          %422 = vmatprep.subr.bf16.mxu0 0
          %423 = vmatpush2.bf16.msra.mxu0 0
          %424 = vmatprep.subr.bf16.mxu0 0
          %425 = vmatpush2.bf16.msra.mxu0 0
          %426 = vmatprep.subr.bf16.mxu0 0
          %427 = vmatpush2.bf16.msra.mxu0 0
          %428 = vmatprep.mubr.bf16.mxu0 0
          %429 = vmatmul.mubr.bf16.gmra.mxu0 %v346
          %v430 = vpop.f32.mrf.mxu0
          %v431 = vadd.f32 0.0, %v430
          %v432 = vpop.f32.mrf.mxu0
          %v433 = vpop.f32.mrf.mxu0
          %v434 = vadd.f32 0.0, %v433
          %v435 = vpop.f32.mrf.mxu0
          %436 = vdwg.mxu0
          %437 = vst [vmem:[#allocation12] sm:$0xff] %v431
          %438 = vst [vmem:[#allocation12 + $0x8] sm:$0xff] %v434
          %v439 = vadd.f32 %v431, %v434
          %v440 = vrot.slane %v439, 4
          %v441 = vadd.f32 %v439, %v440
          %v442 = vrot.slane %v441, 2
          %v443 = vadd.f32 %v441, %v442
          %v444 = vrot.slane %v443, 1
          %v445 = vadd.f32 %v443, %v444
          %v446 = vmul.f32 %v445, 0.125
          %v447 = vmul.f32 %v431, %v431
          %v448 = vmul.f32 %v434, %v434
          %v449 = vadd.f32 %v447, %v448
          %v450 = vrot.slane %v449, 4
          %v451 = vadd.f32 %v449, %v450
          %v452 = vrot.slane %v451, 2
          %v453 = vadd.f32 %v451, %v452
          %v454 = vrot.slane %v453, 1
          %v455 = vadd.f32 %v453, %v454
          %v456 = vmul.f32 %v455, 0.125
          %v457 = vmul.f32 %v446, %v446
          %v458 = vsub.f32 %v456, %v457
          %v459 = vadd.f32 %v458, 1e-05
          %v460 = vrsqrt.pop %v459
          %v461 = vld [vmem:[%s2] sm:$0x1]
          %v462 = vmul.f32 %v460, %v461
          %v463 = vld [vmem:[%s3] sm:$0x1]
          %v464 = vmul.f32 %v446, %v462
          %v465 = vsub.f32 %v463, %v464
          %v466 = vlaneseq
          %v467 = vshrl.u32 %v466, 7
          %v468 = vsub.s32 0, %v467
          %v469 = vrot.slane %v462, %v468
          %v470 = vmul.f32 %v431, %v469
          %v471 = vmul.f32 %v434, %v469
          %v473 = vlaneseq
          %v474 = vshrl.u32 %v473, 7
          %v475 = vsub.s32 0, %v474
          %v476 = vrot.slane %v465, %v475
          %v478 = vadd.f32 %v470, %v476
          %v479 = vadd.f32 %v471, %v476
          %480 = vst [vmem:[#allocation9] sm:$0xff] %v478
          %481 = vst [vmem:[#allocation9 + $0x8] sm:$0xff] %v479
          %v482 = vpack.c.bf16 %v479, %v478
          %v484 = vunpack.c.l.b16 %v482
          %v485 = vunpack.c.h.b16 %v482
          %v486 = vpack.c.b16 %v484, %v484
          %v487 = vpack.c.b16 %v485, %v485
          %490 = vst [vmem:[#allocation2] sm:$0xf] %v486
          %491 = vst [vmem:[#allocation2 + $0x4] sm:$0xf] %v487
        $region56: #{tpu_custom_call.1} parent=39 // pred_fallthru
          _
        %v492 = vld [vmem:[#allocation2] sm:$0xf]
        %v493 = vld [vmem:[#allocation2 + $0x4] sm:$0xf]
        %v494 = vld [vmem:[%s288] sm:$0xf]
        %v495 = vld [vmem:[%s288 + $0x4] sm:$0xf]
        %v496 = vld [vmem:[%s288 + $0x8] sm:$0xf]
        %v497 = vld [vmem:[%s288 + $0xc] sm:$0xf]
        %v498 = vld [vmem:[%s288 + $0x10] sm:$0xf]
        %v499 = vld [vmem:[%s288 + $0x14] sm:$0xf]
        %v500 = vld [vmem:[%s288 + $0x18] sm:$0xf]
        %v501 = vld [vmem:[%s288 + $0x1c] sm:$0xf]
        %v502 = vld [vmem:[%s288 + $0x20] sm:$0xf]
        %v503 = vld [vmem:[%s288 + $0x24] sm:$0xf]
        %v504 = vld [vmem:[%s288 + $0x28] sm:$0xf]
        %v505 = vld [vmem:[%s288 + $0x2c] sm:$0xf]
        %v506 = vld [vmem:[%s288 + $0x30] sm:$0xf]
        %v507 = vld [vmem:[%s288 + $0x34] sm:$0xf]
        %v508 = vld [vmem:[%s288 + $0x38] sm:$0xf]
        %v509 = vld [vmem:[%s288 + $0x3c] sm:$0xf]
        %v512 = vunpack.c.l.b16 %v492
        %v513 = vunpack.c.l.b16 %v493
        %v514 = vpack.c.b16 %v513, %v512
        %v532 = vunpack.c.l.b16 %v494
        %v533 = vunpack.c.l.b16 %v495
        %v534 = vunpack.c.l.b16 %v496
        %v535 = vunpack.c.l.b16 %v497
        %v536 = vunpack.c.l.b16 %v498
        %v537 = vunpack.c.l.b16 %v499
        %v538 = vunpack.c.l.b16 %v500
        %v539 = vunpack.c.l.b16 %v501
        %v540 = vunpack.c.l.b16 %v502
        %v541 = vunpack.c.l.b16 %v503
        %v542 = vunpack.c.l.b16 %v504
        %v543 = vunpack.c.l.b16 %v505
        %v544 = vunpack.c.l.b16 %v506
        %v545 = vunpack.c.l.b16 %v507
        %v546 = vunpack.c.l.b16 %v508
        %v547 = vunpack.c.l.b16 %v509
        %v548 = vpack.c.b16 %v533, %v532
        %v549 = vpack.c.b16 %v535, %v534
        %v550 = vpack.c.b16 %v537, %v536
        %v551 = vpack.c.b16 %v539, %v538
        %v552 = vpack.c.b16 %v541, %v540
        %v553 = vpack.c.b16 %v543, %v542
        %v554 = vpack.c.b16 %v545, %v544
        %v555 = vpack.c.b16 %v547, %v546
        %564 = vmatprep.subr.bf16.mxu0 0
        %565 = vmatpush1.bf16.msra.mxu0 %v555
        %566 = vmatprep.subr.bf16.mxu0 0
        %567 = vmatpush1.bf16.msra.mxu0 %v554
        %568 = vmatprep.subr.bf16.mxu0 0
        %569 = vmatpush1.bf16.msra.mxu0 %v553
        %570 = vmatprep.subr.bf16.mxu0 0
        %571 = vmatpush1.bf16.msra.mxu0 %v552
        %572 = vmatprep.subr.bf16.mxu0 0
        %573 = vmatpush1.bf16.msra.mxu0 %v551
        %574 = vmatprep.subr.bf16.mxu0 0
        %575 = vmatpush1.bf16.msra.mxu0 %v550
        %576 = vmatprep.subr.bf16.mxu0 0
        %577 = vmatpush1.bf16.msra.mxu0 %v549
        %578 = vmatprep.subr.bf16.mxu0 0
        %579 = vmatpush1.bf16.msra.mxu0 %v548
        %580 = vmatprep.subr.bf16.mxu0 0
        %581 = vmatpush2.bf16.msra.mxu0 0
        %582 = vmatprep.subr.bf16.mxu0 0
        %583 = vmatpush2.bf16.msra.mxu0 0
        %584 = vmatprep.subr.bf16.mxu0 0
        %585 = vmatpush2.bf16.msra.mxu0 0
        %586 = vmatprep.subr.bf16.mxu0 0
        %587 = vmatpush2.bf16.msra.mxu0 0
        %588 = vmatprep.subr.bf16.mxu0 0
        %589 = vmatpush2.bf16.msra.mxu0 0
        %590 = vmatprep.subr.bf16.mxu0 0
        %591 = vmatpush2.bf16.msra.mxu0 0
        %592 = vmatprep.subr.bf16.mxu0 0
        %593 = vmatpush2.bf16.msra.mxu0 0
        %594 = vmatprep.subr.bf16.mxu0 0
        %595 = vmatpush2.bf16.msra.mxu0 0
        %596 = vmatprep.mubr.bf16.mxu0 0
        %597 = vmatmul.mubr.bf16.gmra.mxu0 %v514
        %v598 = vpop.f32.mrf.mxu0
        %v599 = vadd.f32 0.0, %v598
        %v600 = vpop.f32.mrf.mxu0
        %v601 = vpop.f32.mrf.mxu0
        %v602 = vadd.f32 0.0, %v601
        %v603 = vpop.f32.mrf.mxu0
        %604 = vdwg.mxu0
        %605 = vst [vmem:[%s316] sm:$0xff] %v599
        %606 = vst [vmem:[%s316 + $0x8] sm:$0xff] %v602
        %s607 = sand.u32 %s25, 1
        %s608 = scalar_lea.sflag [#allocation11], %s607
        %s609 = sand.u32 %s164, 1
        %s610 = smul.addr %s609, 16
        %s611 = scalar_lea.vmem [#allocation10], %s610
        // Predicated region
        $region57: #{tpu_custom_call.1} parent=39 // pred_check
          %p612 = pneg %p148
        $region58: #{tpu_custom_call.1} parent=39 // pred_check_branch
          %614 = sbr.rel (%p612) target = $region60
        $region59: #{tpu_custom_call.1} parent=39 // pred_region
          %s616 = ssub.s32 256, 256
          %617 = vsyncadd [#allocation5], %s616
          %s618 = sshll.u32 [#allocation9], 4
          %s619 = int_to_ptr.vmem [resolvable:$true] %s618
          %624 = dma.vmem_to_hbm [thread:$0]  %s619, 256, %s5, [#allocation5], 128, 128, 8
        $region60: #{tpu_custom_call.1} parent=39 // pred_fallthru
          _
        // Predicated region
        $region61: #{tpu_custom_call.1} parent=39 // pred_check
          %p625 = pneg %p174
        $region62: #{tpu_custom_call.1} parent=39 // pred_check_branch
          %627 = sbr.rel (%p625) target = $region64
        $region63: #{tpu_custom_call.1} parent=39 // pred_region
          %s629 = ssub.s32 256, 256
          %630 = vsyncadd %s608, %s629
          %s631 = smul.addr %s25, 128
          %s632 = scalar_lea.hbm %s6, %s631
          %s633 = sshll.u32 %s611, 4
          %s634 = int_to_ptr.vmem [resolvable:$true] %s633
          %639 = dma.vmem_to_hbm [thread:$0]  %s634, 256, %s632, %s608, 128, 256, 8
        $region64: #{tpu_custom_call.1} parent=39 // pred_fallthru
          _
        // Predicated region
        $region65: #{tpu_custom_call.1} parent=39 // pred_check
          %p640 = pneg %p195
        $region66: #{tpu_custom_call.1} parent=39 // pred_check_branch
          %642 = sbr.rel (%p640) target = $region68
        $region67: #{tpu_custom_call.1} parent=39 // pred_region
          %s644 = ssub.s32 256, 256
          %645 = vsyncadd [#allocation11], %s644
          %s646 = sshll.u32 [#allocation12], 4
          %s647 = int_to_ptr.vmem [resolvable:$true] %s646
          %652 = dma.vmem_to_hbm [thread:$0]  %s647, 256, %s7, [#allocation11], 128, 128, 8
        $region68: #{tpu_custom_call.1} parent=39 // pred_fallthru
          _
        // Predicated region
        $region69: #{tpu_custom_call.1} parent=39 // pred_check
          %p653 = pneg %p148
        $region70: #{tpu_custom_call.1} parent=39 // pred_check_branch
          %655 = sbr.rel (%p653) target = $region72
        $region71: #{tpu_custom_call.1} parent=39 // pred_region
          %656 = dma.done [#allocation5], 256
        $region72: #{tpu_custom_call.1} parent=39 // pred_fallthru
          _
        // Predicated region
        $region73: #{tpu_custom_call.1} parent=39 // pred_check
          %p657 = pneg %p195
        $region74: #{tpu_custom_call.1} parent=39 // pred_check_branch
          %659 = sbr.rel (%p657) target = $region76
        $region75: #{tpu_custom_call.1} parent=39 // pred_region
          %660 = dma.done [#allocation11], 256
        $region76: #{tpu_custom_call.1} parent=39 // pred_fallthru
          _
      $region40: #{tpu_custom_call.1} parent=5 // pred_fallthru
        _
      %p661 = scmp.le.s32.totalorder 2, %s20
      // Predicated region
      $region77: #{tpu_custom_call.1} parent=5 // pred_check
        %p662 = pneg %p661
      $region78: #{tpu_custom_call.1} parent=5 // pred_check_branch
        %664 = sbr.rel (%p662) target = $region80
      $region79: #{tpu_custom_call.1} parent=5 // pred_region
        %s665 = ssub.s32 %s20, 2
        // Predicated region
        $region81: #{tpu_custom_call.1} parent=79 // pred_check
          %p666 = pneg %p180
        $region82: #{tpu_custom_call.1} parent=79 // pred_check_branch
          %668 = sbr.rel (%p666) target = $region84
        $region83: #{tpu_custom_call.1} parent=79 // pred_region
          %s669 = sand.u32 %s26, 1
          %s670 = scalar_lea.sflag [#allocation11], %s669
          %s671 = sand.u32 %s165, 1
          %s672 = smul.addr %s671, 16
          %s673 = scalar_lea.vmem [#allocation10], %s672
          %674 = dma.done %s670, 256
        $region84: #{tpu_custom_call.1} parent=79 // pred_fallthru
          _
      $region80: #{tpu_custom_call.1} parent=5 // pred_fallthru
        _
    $region6: #{tpu_custom_call.1} parent=1 // loop_footer
      %s24 = sadd.s32 1, %s20
    $region7: #{tpu_custom_call.1} parent=1 // loop_footer_branch
      %19 = sbr.rel target = $region3
    $region8: #{tpu_custom_call.1} parent=1 // loop_exit
      _
    %675 = vsyncpa [#allocation4], 1
    %s676 = scalar_lea.sflag [#allocation4], 1
    %677 = vsyncpa %s676, 1
    %678 = vsyncpa [#allocation7], 1
    %679 = vsyncpa [#allocation5], 1
    %s680 = scalar_lea.sflag [#allocation5], 1
    %681 = vsyncpa %s680, 1
    %682 = vsyncpa [#allocation11], 1
    %s683 = scalar_lea.sflag [#allocation11], 1
    %684 = vsyncpa %s683, 1

</llo_original>
